<compile_context>
chip_gen: v6e
topology: v6e:2x2x1
jax: 0.10.0
libtpu: 0.0.40
codegen_flags: <defaults>
</compile_context>

<pallas_src>
import jax
import jax.numpy as jnp
import numpy as np
from jax.experimental import pallas as pl
from jax.experimental.pallas import tpu as pltpu


# ----------------------------- kernels ------------------------------------ #

def ftb_kernel_fused(x_ref, w_ref, shift_ref, o_ref):
    # x_ref: (1, C*F, T_tile)  w_ref: (C*F, C*F)  shift_ref: (C*F, 1) f32
    z = jnp.dot(w_ref[...], x_ref[0], preferred_element_type=jnp.float32)
    o_ref[0] = jnp.maximum(z + shift_ref[...], 0.0).astype(o_ref.dtype)


def ftb_kernel_unfused(x_ref, wfc_ref, w1_ref, w2_ref, shift_ref, o_ref):
    # x_ref: (1, C, F, T_tile)   wfc_ref: (F, F) VMEM
    # w1_ref / w2_ref: (C, C) SMEM (BN-scale-folded 1x1-conv halves)
    # shift_ref: (C,) SMEM       o_ref: (1, C, F, T_tile)
    C = x_ref.shape[1]
    wfc = wfc_ref[...]
    # stage 1: freq_fc along F, one MXU matmul per input channel (C is small)
    att = [jnp.dot(wfc, x_ref[0, c], preferred_element_type=jnp.float32)
           for c in range(C)]
    xs = [x_ref[0, c].astype(jnp.float32) for c in range(C)]
    # stage 2: BN-folded 1x1 conv = channel mix with scalar weights (VPU),
    # epilogue add + ReLU in f32.
    for o in range(C):
        z = shift_ref[o]
        for c in range(C):
            z = z + w1_ref[o, c] * att[c] + w2_ref[o, c] * xs[c]
        o_ref[0, o] = jnp.maximum(z, 0.0).astype(o_ref.dtype)


# ----------------------------- wrapper ------------------------------------ #

def _round_up(n, m):
    return ((n + m - 1) // m) * m


def _cdiv(a, b):
    return (a + b - 1) // b


def ftb_forward(x, wfc, wconv, bias, gamma, beta, mean, var,
                eps=1e-5, t_tile=1024, compute_dtype=jnp.bfloat16, fuse=None):
    """FTB forward.  x: (B, C, F, T) float32 -> (B, C, F, T) (x.dtype)."""
    B, C, F, T = x.shape
    CF = C * F
    out_dtype = x.dtype
    item_c = jnp.dtype(compute_dtype).itemsize
    item_o = jnp.dtype(out_dtype).itemsize

    # ---- wrapper-side weight prep (done once, outside the kernel) ---------
    # eval-mode BatchNorm + conv bias folded to per-channel scale/shift.
    scale = gamma / jnp.sqrt(var + eps)                       # (C,)
    shift = beta - mean * scale + bias * scale                # (C,)
    w1 = scale[:, None] * wconv[:, :C]                        # (C, C) acts on att
    w2 = scale[:, None] * wconv[:, C:]                        # (C, C) acts on x

    # ---- path selection: kron fusion only while it stays cheap ------------
    if fuse is None:
        inflation = CF / float(F + 2 * C)      # fused MACs / two-stage MACs
        fuse = (inflation <= 4.0) and (CF * CF * item_c <= (4 << 20))

    # ---- lane-dense time tiling --------------------------------------------
    t_tile = max(128, (int(t_tile) // 128) * 128)
    t_tile = min(t_tile, _round_up(T, 128))
    # keep >= 2 grid steps so both v7x TensorCores get work (no-op on v5e/v6e)
    if B * _cdiv(T, t_tile) < 2 and _round_up(T, 128) >= 256:
        t_tile = _round_up(_cdiv(_round_up(T, 128), 2), 128)

    # VMEM estimate: 2x (double-buffered) x/out blocks + single-buffered weights
    if fuse:
        def vmem_bytes(tt):
            return (2 * CF * tt * item_c + 2 * CF * tt * item_o
                    + CF * CF * item_c + CF * 4)
    else:
        def vmem_bytes(tt):
            return (2 * CF * tt * item_c + 2 * CF * tt * item_o
                    + F * F * item_c + 2 * C * C * 4 + C * 4)

    while vmem_bytes(t_tile) > (40 << 20) and t_tile > 128:
        t_tile = max(128, _round_up(t_tile // 2, 128))

    T_pad = _round_up(T, t_tile)          # pad T -> unmasked lane-dense stores
    n_t = T_pad // t_tile
    vmem_limit = int(min(48 << 20, max(vmem_bytes(t_tile) + (2 << 20), 8 << 20)))

    cparams = pltpu.CompilerParams(
        dimension_semantics=("parallel", "parallel"),
        vmem_limit_bytes=vmem_limit,
    )

    if fuse:
        # fuse freq_fc + concat + 1x1 conv into one (C*F, C*F) weight:
        #   W_big[(o,g),(c,f)] = w1[o,c]*wfc[g,f] + w2[o,c]*delta_{g,f}
        w_big = (jnp.kron(w1, wfc)
                 + jnp.kron(w2, jnp.eye(F, dtype=wfc.dtype))).astype(compute_dtype)
        shift_big = jnp.repeat(shift, F)[:, None].astype(jnp.float32)   # (CF, 1)

        x2 = x.reshape(B, CF, T).astype(compute_dtype)
        if T_pad != T:
            x2 = jnp.pad(x2, ((0, 0), (0, 0), (0, T_pad - T)))

        out = pl.pallas_call(
            ftb_kernel_fused,
            out_shape=jax.ShapeDtypeStruct((B, CF, T_pad), out_dtype),
            grid_spec=pltpu.PrefetchScalarGridSpec(
                num_scalar_prefetch=0,
                grid=(B, n_t),
                in_specs=[
                    pl.BlockSpec((1, CF, t_tile), lambda b, t: (b, 0, t)),
                    pl.BlockSpec((CF, CF), lambda b, t: (0, 0),
                                 pipeline_mode=pl.Buffered(1)),
                    pl.BlockSpec((CF, 1), lambda b, t: (0, 0),
                                 pipeline_mode=pl.Buffered(1)),
                ],
                out_specs=pl.BlockSpec((1, CF, t_tile), lambda b, t: (b, 0, t)),
            ),
            compiler_params=cparams,
        )(x2, w_big, shift_big)
        return out[:, :, :T].reshape(B, C, F, T)

    # ---- unfused path (production-sized CF): two-stage kernel --------------
    xp = x.astype(compute_dtype)
    if T_pad != T:
        xp = jnp.pad(xp, ((0, 0), (0, 0), (0, 0), (0, T_pad - T)))

    out = pl.pallas_call(
        ftb_kernel_unfused,
        out_shape=jax.ShapeDtypeStruct((B, C, F, T_pad), out_dtype),
        grid_spec=pltpu.PrefetchScalarGridSpec(
            num_scalar_prefetch=0,
            grid=(B, n_t),
            in_specs=[
                pl.BlockSpec((1, C, F, t_tile), lambda b, t: (b, 0, 0, t)),
                pl.BlockSpec((F, F), lambda b, t: (0, 0),
                             pipeline_mode=pl.Buffered(1)),
                pl.BlockSpec(memory_space=pltpu.MemorySpace.SMEM),   # w1
                pl.BlockSpec(memory_space=pltpu.MemorySpace.SMEM),   # w2
                pl.BlockSpec(memory_space=pltpu.MemorySpace.SMEM),   # shift
            ],
            out_specs=pl.BlockSpec((1, C, F, t_tile), lambda b, t: (b, 0, 0, t)),
        ),
        compiler_params=cparams,
    )(xp, wfc.astype(compute_dtype),
      w1.astype(jnp.float32), w2.astype(jnp.float32), shift.astype(jnp.float32))
    return out[:, :, :, :T]


# ----------------------------- reference ----------------------------------- #

def ftb_ref(x, wfc, wconv, bias, gamma, beta, mean, var, eps=1e-5):
    # pure-JAX mirror of the PyTorch forward (eval-mode BatchNorm)
    att = jnp.einsum('gf,bcft->bcgt', wfc, x)
    y = jnp.concatenate([att, x], axis=1)
    z = jnp.einsum('oi,bift->boft', wconv, y) + bias[None, :, None, None]
    inv = (gamma / jnp.sqrt(var + eps))[None, :, None, None]
    zn = (z - mean[None, :, None, None]) * inv + beta[None, :, None, None]
    return jnp.maximum(zn, 0.0)


if __name__ == "__main__":
    # small shapes consistent with FTB(input_dim=F, in_channel=C)
    B, C, F, T = 2, 4, 16, 256
    key = jax.random.PRNGKey(0)
    kx, kw, kc, kb, kg, kbe, km, kv = jax.random.split(key, 8)

    x = jax.random.normal(kx, (B, C, F, T), jnp.float32)
    wfc = 0.1 * jax.random.normal(kw, (F, F), jnp.float32)        # Linear(F, F, bias=False)
    wconv = 0.1 * jax.random.normal(kc, (C, 2 * C), jnp.float32)  # Conv2d(2C->C, 1x1) weight
    bconv = 0.1 * jax.random.normal(kb, (C,), jnp.float32)
    gamma = 1.0 + 0.1 * jax.random.normal(kg, (C,), jnp.float32)  # BatchNorm2d(C) params
    beta = 0.1 * jax.random.normal(kbe, (C,), jnp.float32)
    mean = 0.1 * jax.random.normal(km, (C,), jnp.float32)
    var = 1.0 + 0.1 * jax.random.uniform(kv, (C,), jnp.float32)
    eps = 1e-5
    # TODO(synk): training-mode BatchNorm (batch statistics) not implemented;
    # BN is folded to a per-channel affine (inference/eval semantics).

    ref = ftb_ref(x, wfc, wconv, bconv, gamma, beta, mean, var, eps)

    # 1) fused path, bf16 compute (default): loose tolerance per bf16 inputs
    out = ftb_forward(x, wfc, wconv, bconv, gamma, beta, mean, var, eps=eps)
    out = jax.block_until_ready(out)
    assert out.shape == (B, C, F, T)
    np.testing.assert_allclose(np.asarray(out), np.asarray(ref),
                               rtol=2e-2, atol=2e-2)

    # 2) fused path, f32 compute, ragged T (exercises wrapper-side padding)
    Tr = 200
    out_r = ftb_forward(x[:, :, :, :Tr], wfc, wconv, bconv, gamma, beta, mean,
                        var, eps=eps, t_tile=128, compute_dtype=jnp.float32)
    out_r = jax.block_until_ready(out_r)
    np.testing.assert_allclose(np.asarray(out_r), np.asarray(ref)[:, :, :, :Tr],
                               rtol=1e-4, atol=1e-4)

    # 3) unfused (production-sized-CF) path forced at small shapes, bf16
    out_u = ftb_forward(x, wfc, wconv, bconv, gamma, beta, mean, var, eps=eps,
                        fuse=False)
    out_u = jax.block_until_ready(out_u)
    np.testing.assert_allclose(np.asarray(out_u), np.asarray(ref),
                               rtol=2e-2, atol=2e-2)

    print("KERNEL_OK")
</pallas_src>

<mosaic_0001>
module attributes {stable_mosaic.version = 11 : i64} {
  func.func @ftb_kernel_fused(%arg0: i32, %arg1: i32, %arg2: memref<1x64x256xbf16, #tpu.memory_space<vmem>>, %arg3: memref<64x64xbf16, #tpu.memory_space<vmem>>, %arg4: memref<64x1xf32, #tpu.memory_space<vmem>>, %arg5: memref<1x64x256xf32, #tpu.memory_space<vmem>>) attributes {dimension_semantics = [#tpu.dimension_semantics<parallel>, #tpu.dimension_semantics<parallel>], iteration_bounds = array<i64: 2, 1>, scalar_prefetch = 0 : i64, scratch_operands = 0 : i64, tpu.core_type = #tpu.core_type<tc>, window_params = [{transform_indices = @transform_0, window_bounds = array<i64: 1, 64, 256>}, {pipeline_mode = #tpu.pipeline_mode<synchronous>, transform_indices = @transform_1, window_bounds = array<i64: 64, 64>}, {pipeline_mode = #tpu.pipeline_mode<synchronous>, transform_indices = @transform_2, window_bounds = array<i64: 64, 1>}, {transform_indices = @transform_3, window_bounds = array<i64: 1, 64, 256>}]} {
    %c0 = arith.constant 0 : index
    %c0_0 = arith.constant 0 : index
    %0 = vector.load %arg3[%c0, %c0_0] : memref<64x64xbf16, #tpu.memory_space<vmem>>, vector<64x64xbf16>
    %c0_1 = arith.constant 0 : index
    %c0_2 = arith.constant 0 : index
    %c0_3 = arith.constant 0 : index
    %1 = vector.load %arg2[%c0_1, %c0_2, %c0_3] : memref<1x64x256xbf16, #tpu.memory_space<vmem>>, vector<1x64x256xbf16>
    %2 = vector.shape_cast %1 : vector<1x64x256xbf16> to vector<64x256xbf16>
    %cst = arith.constant dense<0.000000e+00> : vector<64x256xf32>
    %3 = tpu.matmul %0, %2, %cst {dimension_numbers = #tpu.dot_dimension_numbers<[1], [0], [0], [1], [0, 0, 1, 1], [], []>} : vector<64x64xbf16>, vector<64x256xbf16>, vector<64x256xf32> -> vector<64x256xf32>
    %c0_4 = arith.constant 0 : index
    %c0_5 = arith.constant 0 : index
    %4 = vector.load %arg4[%c0_4, %c0_5] : memref<64x1xf32, #tpu.memory_space<vmem>>, vector<64x1xf32>
    %5 = vector.broadcast %4 : vector<64x1xf32> to vector<64x256xf32>
    %6 = arith.addf %3, %5 : vector<64x256xf32>
    %cst_6 = arith.constant 0.000000e+00 : f32
    %7 = vector.broadcast %cst_6 : f32 to vector<64x256xf32>
    %8 = arith.maximumf %6, %7 : vector<64x256xf32>
    %c0_7 = arith.constant 0 : index
    %c0_8 = arith.constant 0 : index
    %c0_9 = arith.constant 0 : index
    %9 = vector.load %arg5[%c0_7, %c0_8, %c0_9] : memref<1x64x256xf32, #tpu.memory_space<vmem>>, vector<1x64x256xf32>
    %10 = vector.shape_cast %9 : vector<1x64x256xf32> to vector<64x256xf32>
    %11 = vector.shape_cast %8 : vector<64x256xf32> to vector<1x64x256xf32>
    tpu.vector_store %arg5[%c0_7, %c0_8, %c0_9], %11 {strides = array<i32>} : memref<1x64x256xf32, #tpu.memory_space<vmem>>, vector<1x64x256xf32>,
    return
  }
  func.func @transform_0(%arg0: i32, %arg1: i32) -> (i32, i32, i32) {
    %c0_i32 = arith.constant 0 : i32
    %c0_i32_0 = arith.constant 0 : i32
    return %arg0, %c0_i32, %arg1 : i32, i32, i32
  }
  func.func @transform_1(%arg0: i32, %arg1: i32) -> (i32, i32) {
    %c0_i32 = arith.constant 0 : i32
    %c0_i32_0 = arith.constant 0 : i32
    %c0_i32_1 = arith.constant 0 : i32
    return %c0_i32, %c0_i32_0 : i32, i32
  }
  func.func @transform_2(%arg0: i32, %arg1: i32) -> (i32, i32) {
    %c0_i32 = arith.constant 0 : i32
    %c0_i32_0 = arith.constant 0 : i32
    %c0_i32_1 = arith.constant 0 : i32
    return %c0_i32, %c0_i32_0 : i32, i32
  }
  func.func @transform_3(%arg0: i32, %arg1: i32) -> (i32, i32, i32) {
    %c0_i32 = arith.constant 0 : i32
    %c0_i32_0 = arith.constant 0 : i32
    return %arg0, %c0_i32, %arg1 : i32, i32, i32
  }
}

</mosaic_0001>

<llo_original>
// kernel: tpu_custom_call.1
$region0: #{tpu_custom_call.1}
  #allocation0 [shape = 'u32[]', space=smem, size = 0x4, offset = 0x4, fixed_abs, tag = 'smem constant byte address 0x4 - core index']
  #allocation1 [shape = 'u32[144,128]{1,0:T(1,128)}', space=vmem, size = 0x12000, scoped, tag = 'internal scratch']
  %s0 = inlined_call_operand.hbm [shape: bf16[2,64,256], index: 0, kind: input, shape index: {}]
  %s1 = inlined_call_operand.vmem [shape: bf16[64,64], index: 1, kind: input, shape index: {}]
  %s2 = inlined_call_operand.vmem [shape: f32[64,1], index: 2, kind: input, shape index: {}]
  %s3 = inlined_call_operand.hbm [shape: f32[2,64,256], index: 3, kind: output, shape index: {}]
  %s4 = sld [smem:[#allocation0]]
  $region49: #{tpu_custom_call.1} parent=0
    _
  %s6 = ssub.s32 1, %s4
  %s7 = scalar_select 0, %s6, %s4
  $region1: #{tpu_custom_call.1} parent=0
    #allocation2 [shape = 'u8[65536]{0}', space=vmem, size = 0x10000, scoped, tag = 'input window, operand 0']
    #allocation3 [shape = 's32[2]{0}', space=sflag, size = 0x8, scoped, tag = 'scoped memory for tpu_custom_call.1']
    #allocation4 [shape = 's32[2]{0}', space=sflag, size = 0x8, scoped, tag = 'scoped memory for tpu_custom_call.1']
    #allocation5 [shape = 'u8[131072]{0}', space=vmem, size = 0x20000, scoped, tag = 'output window, operand 0']
    %8 = vsyncpa [#allocation3], 0
    %s9 = scalar_lea.sflag [#allocation3], 1
    %10 = vsyncpa %s9, 0
    %11 = vsyncpa [#allocation4], 0
    %s12 = scalar_lea.sflag [#allocation4], 1
    %13 = vsyncpa %s12, 0
    loop: start=0, step=1, limit=4
    $region2: #{tpu_custom_call.1} parent=1 // loop_pre_header
      _
    $region3: #{tpu_custom_call.1} parent=1 // loop_header
      %s15 = sphi 0, %s19
      %p16 = scmp.ge.s32.totalorder %s15, 4
      %s22 = sphi 0, %s34
      %s23 = sphi 0, %s30
      %s24 = sphi 0, %s22
      %s25 = sphi 0, %s23
      %s26 = sphi 0, %s24
      %s27 = sphi 0, %s25
      %s39 = sphi 0, %s41
      %s42 = sphi 0, %s39
      %s43 = sphi 0, %s42
      %s59 = sphi 0, %s43
      %s63 = sphi 0, %s63
      %s65 = sphi 0, %s63
      %s66 = sphi 0, %s65
      %s80 = sphi 0, %s66
      %s84 = sphi 0, %s84
      %s86 = sphi 0, %s84
      %s87 = sphi 0, %s86
      %s101 = sphi 0, %s87
      %s109 = sphi 0, %s111
      %s112 = sphi 0, %s109
      %s113 = sphi 0, %s112
      %s129 = sphi 0, %s113
    $region4: #{tpu_custom_call.1} parent=1 // loop_header_branch
      %18 = sbr.rel (%p16) target = $region8
    $region5: #{tpu_custom_call.1} parent=1 // loop_body
      %s20 = ssub.s32 %s15, 1
      %s21 = ssub.s32 %s15, 2
      %s28 = sadd.s32 1, %s23
      %p29 = scmp.ge.s32.totalorder %s28, 1
      %s30 = scalar_select %p29, 0, %s28
      %s31 = sadd.s32 1, %s22
      %s32 = scalar_select %p29, %s31, %s22
      %p33 = scmp.ge.s32.totalorder %s32, 2
      %s34 = scalar_select %p33, 0, %s32
      %s35 = ssub.s32 %s22, %s34
      %s36 = ssub.s32 %s23, %s30
      %s37 = sor.u32 %s35, %s36
      %p38 = scmp.eq.s32.totalorder %s37, 0
      %s40 = sadd.s32 %s39, 1
      %s41 = scalar_select %p38, %s39, %s40
      %p44 = pneg %p38
      %p45 = scmp.eq.s32.totalorder %s15, 1
      %p46 = por %p44, %p45
      %p47 = scmp.ne.s32.totalorder %s39, %s42
      %p48 = scmp.eq.s32.totalorder %s15, 0
      %p49 = por %p47, %p48
      %p50 = scmp.ne.s32.totalorder %s39, %s42
      %p51 = scmp.eq.s32.totalorder %s20, 1
      %p52 = por %p50, %p51
      %p53 = scmp.ne.s32.totalorder %s42, %s43
      %p54 = scmp.eq.s32.totalorder %s20, 0
      %p55 = por %p53, %p54
      %p56 = scmp.ne.s32.totalorder %s42, %s43
      %p57 = scmp.eq.s32.totalorder %s21, 1
      %p58 = por %p56, %p57
      %p60 = scmp.ne.s32.totalorder %s43, %s59
      %p61 = scmp.eq.s32.totalorder %s21, 0
      %p62 = por %p60, %p61
      %s64 = sadd.s32 %s63, 1
      %p67 = scmp.eq.s32.totalorder %s15, 1
      %p68 = scmp.ne.s32.totalorder %s63, %s65
      %p69 = scmp.eq.s32.totalorder %s15, 0
      %p70 = por %p68, %p69
      %p71 = scmp.ne.s32.totalorder %s63, %s65
      %p72 = scmp.eq.s32.totalorder %s20, 1
      %p73 = por %p71, %p72
      %p74 = scmp.ne.s32.totalorder %s65, %s66
      %p75 = scmp.eq.s32.totalorder %s20, 0
      %p76 = por %p74, %p75
      %p77 = scmp.ne.s32.totalorder %s65, %s66
      %p78 = scmp.eq.s32.totalorder %s21, 1
      %p79 = por %p77, %p78
      %p81 = scmp.ne.s32.totalorder %s66, %s80
      %p82 = scmp.eq.s32.totalorder %s21, 0
      %p83 = por %p81, %p82
      %s85 = sadd.s32 %s84, 1
      %p88 = scmp.eq.s32.totalorder %s15, 1
      %p89 = scmp.ne.s32.totalorder %s84, %s86
      %p90 = scmp.eq.s32.totalorder %s15, 0
      %p91 = por %p89, %p90
      %p92 = scmp.ne.s32.totalorder %s84, %s86
      %p93 = scmp.eq.s32.totalorder %s20, 1
      %p94 = por %p92, %p93
      %p95 = scmp.ne.s32.totalorder %s86, %s87
      %p96 = scmp.eq.s32.totalorder %s20, 0
      %p97 = por %p95, %p96
      %p98 = scmp.ne.s32.totalorder %s86, %s87
      %p99 = scmp.eq.s32.totalorder %s21, 1
      %p100 = por %p98, %p99
      %p102 = scmp.ne.s32.totalorder %s87, %s101
      %p103 = scmp.eq.s32.totalorder %s21, 0
      %p104 = por %p102, %p103
      %s105 = ssub.s32 %s22, %s34
      %s106 = ssub.s32 %s23, %s30
      %s107 = sor.u32 %s105, %s106
      %p108 = scmp.eq.s32.totalorder %s107, 0
      %s110 = sadd.s32 %s109, 1
      %s111 = scalar_select %p108, %s109, %s110
      %p114 = pneg %p108
      %p115 = scmp.eq.s32.totalorder %s15, 1
      %p116 = por %p114, %p115
      %p117 = scmp.ne.s32.totalorder %s109, %s112
      %p118 = scmp.eq.s32.totalorder %s15, 0
      %p119 = por %p117, %p118
      %p120 = scmp.ne.s32.totalorder %s109, %s112
      %p121 = scmp.eq.s32.totalorder %s20, 1
      %p122 = por %p120, %p121
      %p123 = scmp.ne.s32.totalorder %s112, %s113
      %p124 = scmp.eq.s32.totalorder %s20, 0
      %p125 = por %p123, %p124
      %p126 = scmp.ne.s32.totalorder %s112, %s113
      %p127 = scmp.eq.s32.totalorder %s21, 1
      %p128 = por %p126, %p127
      %p130 = scmp.ne.s32.totalorder %s113, %s129
      %p131 = scmp.eq.s32.totalorder %s21, 0
      %p132 = por %p130, %p131
      %p133 = scmp.le.s32.totalorder 1, %s15
      %p134 = scmp.lt.s32.totalorder %s15, 3
      %p135 = pnand %p133, %p134
      %p136 = pneg %p135
      // Predicated region
      $region9: #{tpu_custom_call.1} parent=5 // pred_check
        _
      $region10: #{tpu_custom_call.1} parent=5 // pred_check_branch
        %138 = sbr.rel (%p135) target = $region12
      $region11: #{tpu_custom_call.1} parent=5 // pred_region
        %s139 = ssub.s32 %s15, 1
        // Predicated region
        $region13: #{tpu_custom_call.1} parent=11 // pred_check
          %p140 = pneg %p76
        $region14: #{tpu_custom_call.1} parent=11 // pred_check_branch
          %142 = sbr.rel (%p140) target = $region16
        $region15: #{tpu_custom_call.1} parent=11 // pred_region
          _
        $region16: #{tpu_custom_call.1} parent=11 // pred_fallthru
          _
        // Predicated region
        $region17: #{tpu_custom_call.1} parent=11 // pred_check
          %p143 = pneg %p97
        $region18: #{tpu_custom_call.1} parent=11 // pred_check_branch
          %145 = sbr.rel (%p143) target = $region20
        $region19: #{tpu_custom_call.1} parent=11 // pred_region
          _
        $region20: #{tpu_custom_call.1} parent=11 // pred_fallthru
          _
      $region12: #{tpu_custom_call.1} parent=5 // pred_fallthru
        _
      %p146 = scmp.lt.s32.totalorder %s15, 2
      // Predicated region
      $region21: #{tpu_custom_call.1} parent=5 // pred_check
        %p147 = pneg %p146
      $region22: #{tpu_custom_call.1} parent=5 // pred_check_branch
        %149 = sbr.rel (%p147) target = $region24
      $region23: #{tpu_custom_call.1} parent=5 // pred_region
        // Predicated region
        $region25: #{tpu_custom_call.1} parent=23 // pred_check
          %p150 = pneg %p49
        $region26: #{tpu_custom_call.1} parent=23 // pred_check_branch
          %152 = sbr.rel (%p150) target = $region28
        $region27: #{tpu_custom_call.1} parent=23 // pred_region
          %s153 = sand.u32 %s39, 1
          %s154 = scalar_lea.sflag [#allocation3], %s153
          %s155 = sand.u32 %s39, 1
          %s156 = smul.addr %s155, 64
          %s157 = scalar_lea.vmem [#allocation2], %s156
          %s158 = smul.u32 2, %s23
          %s160 = ssub.s32 1024, 1024
          %161 = vsyncadd %s154, %s160
          %s162 = smul.addr %s22, 16
          %s163 = sadd.s32 %s158, %s162
          %s164 = smul.addr %s163, 64
          %s165 = scalar_lea.hbm %s0, %s164
          %s166 = sshll.u32 %s157, 4
          %s167 = int_to_ptr.vmem [resolvable:$true] %s166
          %172 = dma.hbm_to_vmem [thread:$0]  %s165, 1024, %s167, %s154, 128, 128, 8
        $region28: #{tpu_custom_call.1} parent=23 // pred_fallthru
          _
      $region24: #{tpu_custom_call.1} parent=5 // pred_fallthru
        _
      %p173 = scmp.le.s32.totalorder 1, %s15
      %p174 = scmp.lt.s32.totalorder %s15, 3
      %p175 = pnand %p173, %p174
      %p176 = pneg %p175
      // Predicated region
      $region29: #{tpu_custom_call.1} parent=5 // pred_check
        _
      $region30: #{tpu_custom_call.1} parent=5 // pred_check_branch
        %178 = sbr.rel (%p175) target = $region32
      $region31: #{tpu_custom_call.1} parent=5 // pred_region
        %s179 = ssub.s32 %s15, 1
        %s180 = sand.u32 %s42, 1
        %s181 = scalar_lea.sflag [#allocation3], %s180
        %s182 = sand.u32 %s42, 1
        %s183 = smul.addr %s182, 64
        %s184 = scalar_lea.vmem [#allocation2], %s183
        // Predicated region
        $region33: #{tpu_custom_call.1} parent=31 // pred_check
          %p185 = pneg %p55
        $region34: #{tpu_custom_call.1} parent=31 // pred_check_branch
          %187 = sbr.rel (%p185) target = $region36
        $region35: #{tpu_custom_call.1} parent=31 // pred_region
          %188 = dma.done %s181, 1024
        $region36: #{tpu_custom_call.1} parent=31 // pred_fallthru
          _
        %s189 = sand.u32 %s42, 1
        %s190 = scalar_lea.sflag [#allocation3], %s189
        %s191 = sand.u32 %s42, 1
        %s192 = smul.addr %s191, 64
        %s193 = scalar_lea.vmem [#allocation2], %s192
        %p194 = pneg %p55
        %p195 = pneg %p52
        %p196 = pneg %p76
        %p197 = pneg %p73
        %p198 = pneg %p97
        %p199 = pneg %p94
        %p200 = pneg %p125
        %p201 = pneg %p122
        %s202 = sand.u32 %s112, 1
        %s203 = scalar_lea.sflag [#allocation4], %s202
        %s204 = sand.u32 %s112, 1
        %s205 = smul.addr %s204, 128
        %s206 = scalar_lea.vmem [#allocation5], %s205
        %s207 = smul.u32 2, %s25
        %s208 = smul.u32 2, %s25
        %v210 = vld [vmem:[%s1] sm:$0xf]
        %v211 = vld [vmem:[%s1 + $0x4] sm:$0xf]
        %v212 = vld [vmem:[%s1 + $0x8] sm:$0xf]
        %v213 = vld [vmem:[%s1 + $0xc] sm:$0xf]
        %v214 = vld [vmem:[%s1 + $0x10] sm:$0xf]
        %v215 = vld [vmem:[%s1 + $0x14] sm:$0xf]
        %v216 = vld [vmem:[%s1 + $0x18] sm:$0xf]
        %v217 = vld [vmem:[%s1 + $0x1c] sm:$0xf]
        %v218 = vld [vmem:[%s184] sm:$0xff]
        %v219 = vld [vmem:[%s184 + $0x8] sm:$0xff]
        %v220 = vld [vmem:[%s184 + $0x10] sm:$0xff]
        %v221 = vld [vmem:[%s184 + $0x18] sm:$0xff]
        %v222 = vld [vmem:[%s184 + $0x20] sm:$0xff]
        %v223 = vld [vmem:[%s184 + $0x28] sm:$0xff]
        %v224 = vld [vmem:[%s184 + $0x30] sm:$0xff]
        %v225 = vld [vmem:[%s184 + $0x38] sm:$0xff]
        %v226 = vld [vmem:[%s2] sm:$0xff]
        %v227 = vld [vmem:[%s2 + $0x8] sm:$0xff]
        %v228 = vld [vmem:[%s2 + $0x10] sm:$0xff]
        %v229 = vld [vmem:[%s2 + $0x18] sm:$0xff]
        %v230 = vld [vmem:[%s2 + $0x20] sm:$0xff]
        %v231 = vld [vmem:[%s2 + $0x28] sm:$0xff]
        %v232 = vld [vmem:[%s2 + $0x30] sm:$0xff]
        %v233 = vld [vmem:[%s2 + $0x38] sm:$0xff]
        %235 = vset.pattern.permute.xlu0 0
        %236 = vperm.xlu0 %235, %v226
        %v237 = vpop.permute.xlu0 %236
        %240 = vset.pattern.permute.xlu0 0
        %241 = vperm.xlu0 %240, %v227
        %v242 = vpop.permute.xlu0 %241
        %245 = vset.pattern.permute.xlu0 0
        %246 = vperm.xlu0 %245, %v228
        %v247 = vpop.permute.xlu0 %246
        %250 = vset.pattern.permute.xlu0 0
        %251 = vperm.xlu0 %250, %v229
        %v252 = vpop.permute.xlu0 %251
        %255 = vset.pattern.permute.xlu0 0
        %256 = vperm.xlu0 %255, %v230
        %v257 = vpop.permute.xlu0 %256
        %260 = vset.pattern.permute.xlu0 0
        %261 = vperm.xlu0 %260, %v231
        %v262 = vpop.permute.xlu0 %261
        %265 = vset.pattern.permute.xlu0 0
        %266 = vperm.xlu0 %265, %v232
        %v267 = vpop.permute.xlu0 %266
        %270 = vset.pattern.permute.xlu0 0
        %271 = vperm.xlu0 %270, %v233
        %v272 = vpop.permute.xlu0 %271
        %v282 = vunpack.c.l.b16 %v210
        %v283 = vunpack.c.l.b16 %v211
        %v284 = vunpack.c.l.b16 %v212
        %v285 = vunpack.c.l.b16 %v213
        %v286 = vunpack.c.l.b16 %v214
        %v287 = vunpack.c.l.b16 %v215
        %v288 = vunpack.c.l.b16 %v216
        %v289 = vunpack.c.l.b16 %v217
        %v290 = vpack.c.b16 %v283, %v282
        %v291 = vpack.c.b16 %v285, %v284
        %v292 = vpack.c.b16 %v287, %v286
        %v293 = vpack.c.b16 %v289, %v288
        %v302 = vunpack.c.l.b16 %v218
        %v303 = vunpack.c.h.b16 %v218
        %v304 = vunpack.c.l.b16 %v219
        %v305 = vunpack.c.h.b16 %v219
        %v306 = vunpack.c.l.b16 %v220
        %v307 = vunpack.c.h.b16 %v220
        %v308 = vunpack.c.l.b16 %v221
        %v309 = vunpack.c.h.b16 %v221
        %v310 = vunpack.c.l.b16 %v222
        %v311 = vunpack.c.h.b16 %v222
        %v312 = vunpack.c.l.b16 %v223
        %v313 = vunpack.c.h.b16 %v223
        %v314 = vunpack.c.l.b16 %v224
        %v315 = vunpack.c.h.b16 %v224
        %v316 = vunpack.c.l.b16 %v225
        %v317 = vunpack.c.h.b16 %v225
        %v318 = vpack.c.b16 %v304, %v302
        %v319 = vpack.c.b16 %v305, %v303
        %v320 = vpack.c.b16 %v308, %v306
        %v321 = vpack.c.b16 %v309, %v307
        %v322 = vpack.c.b16 %v312, %v310
        %v323 = vpack.c.b16 %v313, %v311
        %v324 = vpack.c.b16 %v316, %v314
        %v325 = vpack.c.b16 %v317, %v315
        %vm334 = vcmask 523264
        %v336 = vsel %vm334, %v290, 0
        %v339 = vsel %vm334, %v291, 0
        %v342 = vsel %vm334, %v292, 0
        %v345 = vsel %vm334, %v293, 0
        %347 = vmatprep.subr.bf16.mxu0 0
        %348 = vmatpush1.bf16.msra.mxu0 0
        %349 = vmatprep.subr.bf16.mxu0 0
        %350 = vmatpush1.bf16.msra.mxu0 0
        %351 = vmatprep.subr.bf16.mxu0 0
        %352 = vmatpush1.bf16.msra.mxu0 0
        %353 = vmatprep.subr.bf16.mxu0 0
        %354 = vmatpush1.bf16.msra.mxu0 0
        %355 = vmatprep.subr.bf16.mxu0 %v325
        %356 = vmatpush1.bf16.msra.mxu0 %v324
        %357 = vmatprep.subr.bf16.mxu0 %v323
        %358 = vmatpush1.bf16.msra.mxu0 %v322
        %359 = vmatprep.subr.bf16.mxu0 %v321
        %360 = vmatpush1.bf16.msra.mxu0 %v320
        %361 = vmatprep.subr.bf16.mxu0 %v319
        %362 = vmatpush1.bf16.msra.mxu0 %v318
        %363 = vmatprep.subr.bf16.mxu0 0
        %364 = vmatpush2.bf16.msra.mxu0 0
        %365 = vmatprep.subr.bf16.mxu0 0
        %366 = vmatpush2.bf16.msra.mxu0 0
        %367 = vmatprep.subr.bf16.mxu0 0
        %368 = vmatpush2.bf16.msra.mxu0 0
        %369 = vmatprep.subr.bf16.mxu0 0
        %370 = vmatpush2.bf16.msra.mxu0 0
        %371 = vmatprep.subr.bf16.mxu0 0
        %372 = vmatpush2.bf16.msra.mxu0 0
        %373 = vmatprep.subr.bf16.mxu0 0
        %374 = vmatpush2.bf16.msra.mxu0 0
        %375 = vmatprep.subr.bf16.mxu0 0
        %376 = vmatpush2.bf16.msra.mxu0 0
        %377 = vmatprep.subr.bf16.mxu0 0
        %378 = vmatpush2.bf16.msra.mxu0 0
        %379 = vmatprep.mubr.bf16.mxu0 0
        %380 = vmatmul.mubr.bf16.gmra.mxu0 %v336
        %v381 = vpop.f32.mrf.mxu0
        %v382 = vadd.f32 %v237, %v381
        %v383 = vpop.f32.mrf.mxu0
        %v384 = vadd.f32 %v237, %v383
        %v385 = vpop.f32.mrf.mxu0
        %v386 = vadd.f32 %v242, %v385
        %v387 = vpop.f32.mrf.mxu0
        %v388 = vadd.f32 %v242, %v387
        %389 = vmatprep.mubr.bf16.mxu0 0
        %390 = vmatmul.mubr.bf16.gmra.mxu0 %v339
        %v391 = vpop.f32.mrf.mxu0
        %v392 = vadd.f32 %v247, %v391
        %v393 = vpop.f32.mrf.mxu0
        %v394 = vadd.f32 %v247, %v393
        %v395 = vpop.f32.mrf.mxu0
        %v396 = vadd.f32 %v252, %v395
        %v397 = vpop.f32.mrf.mxu0
        %v398 = vadd.f32 %v252, %v397
        %399 = vmatprep.mubr.bf16.mxu0 0
        %400 = vmatmul.mubr.bf16.gmra.mxu0 %v342
        %v401 = vpop.f32.mrf.mxu0
        %v402 = vadd.f32 %v257, %v401
        %v403 = vpop.f32.mrf.mxu0
        %v404 = vadd.f32 %v257, %v403
        %v405 = vpop.f32.mrf.mxu0
        %v406 = vadd.f32 %v262, %v405
        %v407 = vpop.f32.mrf.mxu0
        %v408 = vadd.f32 %v262, %v407
        %409 = vmatprep.mubr.bf16.mxu0 0
        %410 = vmatmul.mubr.bf16.gmra.mxu0 %v345
        %v411 = vpop.f32.mrf.mxu0
        %v412 = vadd.f32 %v267, %v411
        %v413 = vpop.f32.mrf.mxu0
        %v414 = vadd.f32 %v267, %v413
        %v415 = vpop.f32.mrf.mxu0
        %v416 = vadd.f32 %v272, %v415
        %v417 = vpop.f32.mrf.mxu0
        %v418 = vadd.f32 %v272, %v417
        %419 = vdwg.mxu0
        %v420 = vmax.f32 %v382, 0.0
        %v421 = vmax.f32 %v384, 0.0
        %v422 = vmax.f32 %v386, 0.0
        %v423 = vmax.f32 %v388, 0.0
        %v424 = vmax.f32 %v392, 0.0
        %v425 = vmax.f32 %v394, 0.0
        %v426 = vmax.f32 %v396, 0.0
        %v427 = vmax.f32 %v398, 0.0
        %v428 = vmax.f32 %v402, 0.0
        %v429 = vmax.f32 %v404, 0.0
        %v430 = vmax.f32 %v406, 0.0
        %v431 = vmax.f32 %v408, 0.0
        %v432 = vmax.f32 %v412, 0.0
        %v433 = vmax.f32 %v414, 0.0
        %v434 = vmax.f32 %v416, 0.0
        %v435 = vmax.f32 %v418, 0.0
        %436 = vst [vmem:[%s206] sm:$0xff] %v420
        %437 = vst [vmem:[%s206 + $0x8] sm:$0xff] %v421
        %438 = vst [vmem:[%s206 + $0x10] sm:$0xff] %v422
        %439 = vst [vmem:[%s206 + $0x18] sm:$0xff] %v423
        %440 = vst [vmem:[%s206 + $0x20] sm:$0xff] %v424
        %441 = vst [vmem:[%s206 + $0x28] sm:$0xff] %v425
        %442 = vst [vmem:[%s206 + $0x30] sm:$0xff] %v426
        %443 = vst [vmem:[%s206 + $0x38] sm:$0xff] %v427
        %444 = vst [vmem:[%s206 + $0x40] sm:$0xff] %v428
        %445 = vst [vmem:[%s206 + $0x48] sm:$0xff] %v429
        %446 = vst [vmem:[%s206 + $0x50] sm:$0xff] %v430
        %447 = vst [vmem:[%s206 + $0x58] sm:$0xff] %v431
        %448 = vst [vmem:[%s206 + $0x60] sm:$0xff] %v432
        %449 = vst [vmem:[%s206 + $0x68] sm:$0xff] %v433
        %450 = vst [vmem:[%s206 + $0x70] sm:$0xff] %v434
        %451 = vst [vmem:[%s206 + $0x78] sm:$0xff] %v435
        %s452 = sand.u32 %s112, 1
        %s453 = scalar_lea.sflag [#allocation4], %s452
        %s454 = sand.u32 %s112, 1
        %s455 = smul.addr %s454, 128
        %s456 = scalar_lea.vmem [#allocation5], %s455
        // Predicated region
        $region37: #{tpu_custom_call.1} parent=31 // pred_check
          %p457 = pneg %p122
        $region38: #{tpu_custom_call.1} parent=31 // pred_check_branch
          %459 = sbr.rel (%p457) target = $region40
        $region39: #{tpu_custom_call.1} parent=31 // pred_region
          %s460 = smul.u32 2, %s25
          %s462 = ssub.s32 2048, 2048
          %463 = vsyncadd %s453, %s462
          %s464 = smul.addr %s24, 16
          %s465 = sadd.s32 %s460, %s464
          %s466 = smul.addr %s465, 128
          %s467 = scalar_lea.hbm %s3, %s466
          %s468 = sshll.u32 %s456, 4
          %s469 = int_to_ptr.vmem [resolvable:$true] %s468
          %474 = dma.vmem_to_hbm [thread:$0]  %s469, 2048, %s467, %s453, 256, 256, 16
        $region40: #{tpu_custom_call.1} parent=31 // pred_fallthru
          _
      $region32: #{tpu_custom_call.1} parent=5 // pred_fallthru
        _
      %p475 = scmp.le.s32.totalorder 2, %s15
      // Predicated region
      $region41: #{tpu_custom_call.1} parent=5 // pred_check
        %p476 = pneg %p475
      $region42: #{tpu_custom_call.1} parent=5 // pred_check_branch
        %478 = sbr.rel (%p476) target = $region44
      $region43: #{tpu_custom_call.1} parent=5 // pred_region
        %s479 = ssub.s32 %s15, 2
        // Predicated region
        $region45: #{tpu_custom_call.1} parent=43 // pred_check
          %p480 = pneg %p128
        $region46: #{tpu_custom_call.1} parent=43 // pred_check_branch
          %482 = sbr.rel (%p480) target = $region48
        $region47: #{tpu_custom_call.1} parent=43 // pred_region
          %s483 = sand.u32 %s113, 1
          %s484 = scalar_lea.sflag [#allocation4], %s483
          %s485 = sand.u32 %s113, 1
          %s486 = smul.addr %s485, 128
          %s487 = scalar_lea.vmem [#allocation5], %s486
          %488 = dma.done %s484, 2048
        $region48: #{tpu_custom_call.1} parent=43 // pred_fallthru
          _
      $region44: #{tpu_custom_call.1} parent=5 // pred_fallthru
        _
    $region6: #{tpu_custom_call.1} parent=1 // loop_footer
      %s19 = sadd.s32 1, %s15
    $region7: #{tpu_custom_call.1} parent=1 // loop_footer_branch
      %14 = sbr.rel target = $region3
    $region8: #{tpu_custom_call.1} parent=1 // loop_exit
      _
    %489 = vsyncpa [#allocation3], 1
    %s490 = scalar_lea.sflag [#allocation3], 1
    %491 = vsyncpa %s490, 1
    %492 = vsyncpa [#allocation4], 1
    %s493 = scalar_lea.sflag [#allocation4], 1
    %494 = vsyncpa %s493, 1

</llo_original>
